<compile_context>
chip_gen: v7x
topology: tpu7x:2x2x1
jax: 0.10.0
libtpu: 0.0.40
codegen_flags: <defaults>
</compile_context>

<pallas_src>
import functools

import jax
import jax.numpy as jnp
from jax import lax
from jax.experimental import pallas as pl
from jax.experimental.pallas import tpu as pltpu

EPS = 1e-6
LANES = 128
_MAX_ROWS_PER_TILE = 8192           # 8192 x 128 x 4B = 4 MiB per f32 input block
_SMALL_FEATURE_BYTES = 512 * 1024   # per-batch f32 bytes below which we batch-block
_SMALL_BLOCK_TARGET = 2 << 20       # target per-input block bytes for batch-blocked path


def _round_up(x, m):
    return ((x + m - 1) // m) * m


# ----------------------------------------------------------------------------
# Small-feature path: batch-blocked, full feature axis per block (no padding).
# ----------------------------------------------------------------------------
def _dice_sums_small_kernel(x_ref, t_ref, inter_ref, card_ref):
    x = x_ref[...].astype(jnp.float32)          # (bt, n)
    t = t_ref[...].astype(jnp.float32)
    inter_ref[...] = jnp.sum(x * t, axis=1, keepdims=True)
    card_ref[...] = jnp.sum(x + t, axis=1, keepdims=True)


def _dice_sums_small(x, t, b, n):
    per_batch_f32 = max(n * 4, 1)
    bt_target = max(1, _SMALL_BLOCK_TARGET // per_batch_f32)
    if b <= 8 or bt_target >= b:
        bt = b                                   # single (or full-batch) block
    else:
        bt = min(b, max(8, (bt_target // 8) * 8))  # keep sublane blocks 8-aligned
    nbt = pl.cdiv(b, bt)
    b_pad = nbt * bt                             # padded output only (tiny)

    blk_rows = _round_up(bt, 8)
    blk_cols = _round_up(n, LANES)
    in_bytes = blk_rows * blk_cols * (x.dtype.itemsize + t.dtype.itemsize)
    vmem_limit = int(2 * in_bytes                     # double-buffered inputs
                     + 4 * blk_rows * blk_cols * 4    # headroom for f32 temporaries
                     + (8 << 20))                     # compiler internals / outputs

    cost = pl.CostEstimate(
        flops=3 * b * n,
        transcendentals=0,
        bytes_accessed=b * n * (x.dtype.itemsize + t.dtype.itemsize) + 8 * b_pad,
    )

    inter, card = pl.pallas_call(
        _dice_sums_small_kernel,
        out_shape=(jax.ShapeDtypeStruct((b_pad, 1), jnp.float32),
                   jax.ShapeDtypeStruct((b_pad, 1), jnp.float32)),
        grid=(nbt,),
        in_specs=[pl.BlockSpec((bt, n), lambda i: (i, 0)),
                  pl.BlockSpec((bt, n), lambda i: (i, 0))],
        out_specs=(pl.BlockSpec((bt, 1), lambda i: (i, 0)),
                   pl.BlockSpec((bt, 1), lambda i: (i, 0))),
        compiler_params=pltpu.CompilerParams(
            dimension_semantics=("parallel",),
            vmem_limit_bytes=vmem_limit,
        ),
        cost_estimate=cost,
    )(x, t)
    # Rows >= b (if any) come from the padded output / edge-clamped reads and
    # are simply discarded.
    return inter[:b, 0], card[:b, 0]


# ----------------------------------------------------------------------------
# Large-feature path: (rows, 128) streaming reduction with optional 2-way
# split of the row range so both v7x TensorCores have work for small/odd B.
# ----------------------------------------------------------------------------
def _dice_sums_large_kernel(x_ref, t_ref, inter_ref, card_ref, inter_sc, card_sc,
                            *, total_rows, rows_per_tile, tiles_per_split,
                            any_ragged):
    s = pl.program_id(0)
    k = pl.program_id(2)
    nk = pl.num_programs(2)

    @pl.when(k == 0)
    def _():
        inter_sc[...] = jnp.zeros_like(inter_sc)
        card_sc[...] = jnp.zeros_like(card_sc)

    g = s * tiles_per_split + k                    # global row-tile index
    rem = total_rows - g * rows_per_tile           # valid rows in this tile
    nsub = rows_per_tile // 8

    def accum(masked):
        x = x_ref[...].astype(jnp.float32)         # (rows_per_tile, 128)
        t = t_ref[...].astype(jnp.float32)
        if masked:
            rid = lax.broadcasted_iota(jnp.int32, x.shape, 0)
            keep = rid < rem
            x = jnp.where(keep, x, 0.0)
            t = jnp.where(keep, t, 0.0)
        # Sublane-shaped partials: reshape to (nsub, 8, 128) is tile-aligned
        # (free) and the axis-0 sum is pure VALU; the 8x128 -> scalar reduce
        # is deferred to the epilogue.
        inter_sc[...] += jnp.sum((x * t).reshape(nsub, 8, LANES), axis=0)
        card_sc[...] += jnp.sum((x + t).reshape(nsub, 8, LANES), axis=0)

    if not any_ragged:
        accum(False)
    else:
        # Steady-state full tiles stay on the cheap unmasked path; only the
        # ragged tail tile pays iota+compare+select; fully-OOB tiles (from the
        # TC-split rounding) are skipped.
        pl.when(rem >= rows_per_tile)(lambda: accum(False))
        pl.when(jnp.logical_and(rem > 0, rem < rows_per_tile))(lambda: accum(True))

    @pl.when(k == nk - 1)
    def _():
        inter_ref[...] = jnp.sum(inter_sc[...]).reshape(1, 1)
        card_ref[...] = jnp.sum(card_sc[...]).reshape(1, 1)


def _dice_sums_large(x, t, b, n, max_rows_per_tile):
    n_main = (n // LANES) * LANES
    tail = n - n_main

    inter_tail = None
    card_tail = None
    if tail:
        # Ragged tail (< 128 columns per batch): tiny plain-jnp partial sums,
        # combined with the kernel partials below.  No jnp.pad of the full
        # tensors anywhere.
        xt_ = x[:, n_main:].astype(jnp.float32)
        tt_ = t[:, n_main:].astype(jnp.float32)
        inter_tail = jnp.sum(xt_ * tt_, axis=1)
        card_tail = jnp.sum(xt_ + tt_, axis=1)
        # TODO(synk): the main-region slice below still materializes one copy;
        # a fully copy-free ragged large path would need manual DMA on the
        # unaligned flat array.
        x = x[:, :n_main]
        t = t[:, :n_main]

    rows = n_main // LANES
    xm = x.reshape(b, rows, LANES)
    tm = t.reshape(b, rows, LANES)

    # Balanced tiling; split the reduction range 2-way when the batch alone
    # cannot keep both v7x TensorCores busy (B odd, e.g. B == 1).
    base_tiles = pl.cdiv(rows, max_rows_per_tile)
    nsplit = 2 if (base_tiles >= 2 and b % 2 == 1) else 1
    ntiles = nsplit * pl.cdiv(base_tiles, nsplit)
    rows_per_tile = _round_up(pl.cdiv(rows, ntiles), 8)
    if rows_per_tile > rows:                       # only possible when ntiles == 1
        rows_per_tile = (rows // 8) * 8            # rows >= 1024 in this path
    num_tiles = pl.cdiv(rows, rows_per_tile)
    kt = pl.cdiv(num_tiles, nsplit)
    need_clamp = (nsplit * kt) != num_tiles
    any_ragged = need_clamp or (rows % rows_per_tile != 0)

    last_tile = num_tiles - 1
    if need_clamp:
        def in_map(s, bi, k):
            return (bi, jnp.minimum(s * kt + k, last_tile), 0)
    else:
        def in_map(s, bi, k):
            return (bi, s * kt + k, 0)

    kernel = functools.partial(
        _dice_sums_large_kernel,
        total_rows=rows,
        rows_per_tile=rows_per_tile,
        tiles_per_split=kt,
        any_ragged=any_ragged,
    )

    blk_x = rows_per_tile * LANES * x.dtype.itemsize
    blk_t = rows_per_tile * LANES * t.dtype.itemsize
    blk_f32 = rows_per_tile * LANES * 4
    vmem_limit = int(2 * (blk_x + blk_t)   # double-buffered input blocks
                     + 4 * blk_f32         # headroom for unfused f32 temporaries
                     + (8 << 20))          # scratch + compiler internals

    cost = pl.CostEstimate(
        flops=3 * b * rows * LANES,
        transcendentals=0,
        bytes_accessed=b * rows * LANES * (x.dtype.itemsize + t.dtype.itemsize)
        + 8 * nsplit * b,
    )

    inter_p, card_p = pl.pallas_call(
        kernel,
        out_shape=(jax.ShapeDtypeStruct((nsplit, b, 1, 1), jnp.float32),
                   jax.ShapeDtypeStruct((nsplit, b, 1, 1), jnp.float32)),
        grid_spec=pltpu.PrefetchScalarGridSpec(
            num_scalar_prefetch=0,
            grid=(nsplit, b, kt),
            in_specs=[
                pl.BlockSpec((None, rows_per_tile, LANES), in_map),
                pl.BlockSpec((None, rows_per_tile, LANES), in_map),
            ],
            out_specs=[
                pl.BlockSpec((None, None, 1, 1), lambda s, bi, k: (s, bi, 0, 0)),
                pl.BlockSpec((None, None, 1, 1), lambda s, bi, k: (s, bi, 0, 0)),
            ],
            scratch_shapes=[
                pltpu.VMEM((8, LANES), jnp.float32),
                pltpu.VMEM((8, LANES), jnp.float32),
            ],
        ),
        compiler_params=pltpu.CompilerParams(
            dimension_semantics=("parallel", "parallel", "arbitrary"),
            vmem_limit_bytes=vmem_limit,
        ),
        cost_estimate=cost,
    )(xm, tm)

    inter = jnp.sum(inter_p, axis=0).reshape(b)
    card = jnp.sum(card_p, axis=0).reshape(b)
    if tail:
        inter = inter + inter_tail
        card = card + card_tail
    return inter, card


# ----------------------------------------------------------------------------
# Public entry point.
# ----------------------------------------------------------------------------
@functools.partial(jax.jit, static_argnames=("max_rows_per_tile",))
def neg_dice_loss(inp, target, *, max_rows_per_tile=_MAX_ROWS_PER_TILE):
    if inp.ndim != 4:
        raise ValueError(f"Invalid input shape, we expect BxCxHxW. Got: {inp.shape}")
    if inp.shape[-2:] != target.shape[-2:]:
        raise ValueError("input and target shapes must be the same. "
                         f"Got: {inp.shape} vs {target.shape}")
    if inp.shape != target.shape:
        raise ValueError("input and target must have identical shapes. "
                         f"Got: {inp.shape} vs {target.shape}")
    # TODO(synk): torch's is_tensor / same-device checks have no JAX equivalent.

    b, c, h, w = inp.shape
    n = c * h * w
    x = inp.reshape(b, n)       # contiguous trailing-dim merge: free (bitcast)
    t = target.reshape(b, n)

    if n * 4 <= _SMALL_FEATURE_BYTES:
        inter, card = _dice_sums_small(x, t, b, n)
    else:
        inter, card = _dice_sums_large(x, t, b, n, max_rows_per_tile)

    dice = 2.0 * inter / (card + EPS)
    return -jnp.mean(dice)


def neg_dice_loss_ref(inp, target):
    dims = (1, 2, 3)
    intersection = jnp.sum(inp * target, axis=dims)
    cardinality = jnp.sum(inp + target, axis=dims)
    dice = 2.0 * intersection / (cardinality + EPS)
    return -jnp.mean(dice)


if __name__ == "__main__":
    key = jax.random.PRNGKey(0)
    ks = jax.random.split(key, 6)

    def make(kx, kt_, shape):
        x = jax.nn.sigmoid(jax.random.normal(kx, shape, dtype=jnp.float32))
        t = (jax.random.uniform(kt_, shape) > 0.5).astype(jnp.float32)
        return x, t

    # Case 1: small, lane-aligned features (batch-blocked path).
    x1, t1 = make(ks[0], ks[1], (2, 4, 16, 16))
    o1 = neg_dice_loss(x1, t1)
    jax.block_until_ready(o1)
    r1 = neg_dice_loss_ref(x1, t1)
    assert jnp.allclose(o1, r1, atol=1e-5, rtol=1e-5), (o1, r1)

    # Case 2: small, non-128-aligned feature count (no pad, no copies).
    x2, t2 = make(ks[2], ks[3], (3, 3, 20, 20))          # N = 1200
    o2 = neg_dice_loss(x2, t2)
    jax.block_until_ready(o2)
    r2 = neg_dice_loss_ref(x2, t2)
    assert jnp.allclose(o2, r2, atol=1e-5, rtol=1e-5), (o2, r2)

    # Case 3: large-feature streaming path with a ragged feature tail handled
    # by the tiny jnp partial sum (N = 131215, rows = 1025).
    x3, t3 = make(ks[4], ks[5], (3, 5, 163, 161))
    o3 = neg_dice_loss(x3, t3)
    jax.block_until_ready(o3)
    r3 = neg_dice_loss_ref(x3, t3)
    assert jnp.allclose(o3, r3, atol=1e-4, rtol=5e-4), (o3, r3)

    # Case 4: same data, forced smaller row tile -> exercises the 2-way
    # TensorCore split, balanced tiles and the masked tail tile.
    o4 = neg_dice_loss(x3, t3, max_rows_per_tile=384)
    jax.block_until_ready(o4)
    assert jnp.allclose(o4, r3, atol=1e-4, rtol=5e-4), (o4, r3)

    # Case 5: forced tiny row tile -> odd global tile count, index-clamped
    # fully-OOB tile in the second split is skipped.
    o5 = neg_dice_loss(x3, t3, max_rows_per_tile=16)
    jax.block_until_ready(o5)
    assert jnp.allclose(o5, r3, atol=1e-4, rtol=5e-4), (o5, r3)

    print("KERNEL_OK")
</pallas_src>

<mosaic_0001>
module attributes {stable_mosaic.version = 11 : i64} {
  func.func @_dice_sums_small_kernel(%arg0: i32, %arg1: memref<2x1024xf32, #tpu.memory_space<vmem>>, %arg2: memref<2x1024xf32, #tpu.memory_space<vmem>>, %arg3: memref<2x1xf32, #tpu.memory_space<vmem>>, %arg4: memref<2x1xf32, #tpu.memory_space<vmem>>) attributes {dimension_semantics = [#tpu.dimension_semantics<parallel>], iteration_bounds = array<i64: 1>, scalar_prefetch = 0 : i64, scratch_operands = 0 : i64, tpu.core_type = #tpu.core_type<tc>, window_params = [{transform_indices = @transform_0, window_bounds = array<i64: 2, 1024>}, {transform_indices = @transform_1, window_bounds = array<i64: 2, 1024>}, {transform_indices = @transform_2, window_bounds = array<i64: 2, 1>}, {transform_indices = @transform_3, window_bounds = array<i64: 2, 1>}]} {
    %c0 = arith.constant 0 : index
    %c0_0 = arith.constant 0 : index
    %0 = vector.load %arg1[%c0, %c0_0] : memref<2x1024xf32, #tpu.memory_space<vmem>>, vector<2x1024xf32>
    %c0_1 = arith.constant 0 : index
    %c0_2 = arith.constant 0 : index
    %1 = vector.load %arg2[%c0_1, %c0_2] : memref<2x1024xf32, #tpu.memory_space<vmem>>, vector<2x1024xf32>
    %2 = arith.mulf %0, %1 : vector<2x1024xf32>
    %cst = arith.constant dense<0.000000e+00> : vector<2xf32>
    %3 = vector.multi_reduction <add>, %2, %cst [1] : vector<2x1024xf32> to vector<2xf32>
    %4 = vector.shape_cast %3 : vector<2xf32> to vector<2x1xf32>
    %c0_3 = arith.constant 0 : index
    %c0_4 = arith.constant 0 : index
    %5 = vector.load %arg3[%c0_3, %c0_4] : memref<2x1xf32, #tpu.memory_space<vmem>>, vector<2x1xf32>
    tpu.vector_store %arg3[%c0_3, %c0_4], %4 {strides = array<i32>} : memref<2x1xf32, #tpu.memory_space<vmem>>, vector<2x1xf32>,
    %6 = arith.addf %0, %1 : vector<2x1024xf32>
    %cst_5 = arith.constant dense<0.000000e+00> : vector<2xf32>
    %7 = vector.multi_reduction <add>, %6, %cst_5 [1] : vector<2x1024xf32> to vector<2xf32>
    %8 = vector.shape_cast %7 : vector<2xf32> to vector<2x1xf32>
    %c0_6 = arith.constant 0 : index
    %c0_7 = arith.constant 0 : index
    %9 = vector.load %arg4[%c0_6, %c0_7] : memref<2x1xf32, #tpu.memory_space<vmem>>, vector<2x1xf32>
    tpu.vector_store %arg4[%c0_6, %c0_7], %8 {strides = array<i32>} : memref<2x1xf32, #tpu.memory_space<vmem>>, vector<2x1xf32>,
    return
  }
  func.func @transform_0(%arg0: i32) -> (i32, i32) {
    %c0_i32 = arith.constant 0 : i32
    %c0_i32_0 = arith.constant 0 : i32
    return %arg0, %c0_i32 : i32, i32
  }
  func.func @transform_1(%arg0: i32) -> (i32, i32) {
    %c0_i32 = arith.constant 0 : i32
    %c0_i32_0 = arith.constant 0 : i32
    return %arg0, %c0_i32 : i32, i32
  }
  func.func @transform_2(%arg0: i32) -> (i32, i32) {
    %c0_i32 = arith.constant 0 : i32
    %c0_i32_0 = arith.constant 0 : i32
    return %arg0, %c0_i32 : i32, i32
  }
  func.func @transform_3(%arg0: i32) -> (i32, i32) {
    %c0_i32 = arith.constant 0 : i32
    %c0_i32_0 = arith.constant 0 : i32
    return %arg0, %c0_i32 : i32, i32
  }
}

</mosaic_0001>

<llo_original>
// kernel: neg_dice_loss.1
$region0: #{neg_dice_loss.1}
  #allocation0 [shape = 'u32[]', space=smem, size = 0x4, offset = 0x4, fixed_abs, tag = 'smem constant byte address 0x4 - core index']
  #allocation1 [shape = 'u32[144,128]{1,0:T(1,128)}', space=vmem, size = 0x12000, scoped, tag = 'internal scratch']
  %s0 = inlined_call_operand.vmem [shape: f32[2,1024], index: 0, kind: input, shape index: {}]
  %s1 = inlined_call_operand.vmem [shape: f32[2,1024], index: 1, kind: input, shape index: {}]
  %s2 = inlined_call_operand.vmem [shape: f32[2,1], index: 2, kind: output, shape index: {0}]
  %s3 = inlined_call_operand.vmem [shape: f32[2,1], index: 3, kind: output, shape index: {1}]
  %4 = xla_tuple %s2, %s3
  %s5 = sld [smem:[#allocation0]]
  $region26: #{neg_dice_loss.1} parent=0
    _
  %s7 = ssub.s32 1, %s5
  %s8 = scalar_select 0, %s7, %s5
  // Predicated region
  $region2: #{neg_dice_loss.1} parent=0 // pred_check
    _
  $region3: #{neg_dice_loss.1} parent=0 // pred_check_branch
    %10 = sbr.rel (0) target = $region5
  $region4: #{neg_dice_loss.1} parent=0 // pred_region
    _
  $region5: #{neg_dice_loss.1} parent=0 // pred_fallthru
    _
  // Predicated region
  $region6: #{neg_dice_loss.1} parent=0 // pred_check
    _
  $region7: #{neg_dice_loss.1} parent=0 // pred_check_branch
    %12 = sbr.rel (0) target = $region9
  $region8: #{neg_dice_loss.1} parent=0 // pred_region
    _
  $region9: #{neg_dice_loss.1} parent=0 // pred_fallthru
    _
  %v13 = vld [vmem:[%s0] sm:$0xff]
  %v14 = vld [vmem:[%s0 + $0x8] sm:$0xff]
  %v15 = vld [vmem:[%s1] sm:$0xff]
  %v16 = vld [vmem:[%s1 + $0x8] sm:$0xff]
  %v17 = vmul.f32 %v13, %v15
  %v18 = vmul.f32 %v14, %v16
  %v21 = vcombine.high %v17, %v17
  %v23 = vunpack.c.l.s4 1983009808
  %v24 = vunpack.c.0.s8 %v23
  %v25 = vlaneseq
  %v26 = vshrl.u32 %v25, 7
  %v27 = vsub.s32 %v24, %v26
  %v28 = vrot.slane %v17, %v27
  %v30 = vunpack.c.l.s4 1983009808
  %v31 = vunpack.c.0.s8 %v30
  %v32 = vlaneseq
  %v33 = vshrl.u32 %v32, 7
  %v34 = vsub.s32 %v31, %v33
  %v35 = vrot.slane %v21, %v34
  %v36 = vcombine.high %v28, %v28
  %v37 = vcombine.high %v35, %v35
  %v38 = vcombine.high %v18, %v18
  %v40 = vunpack.c.l.s4 1983009808
  %v41 = vunpack.c.0.s8 %v40
  %v42 = vlaneseq
  %v43 = vshrl.u32 %v42, 7
  %v44 = vsub.s32 %v41, %v43
  %v45 = vrot.slane %v18, %v44
  %v47 = vunpack.c.l.s4 1983009808
  %v48 = vunpack.c.0.s8 %v47
  %v49 = vlaneseq
  %v50 = vshrl.u32 %v49, 7
  %v51 = vsub.s32 %v48, %v50
  %v52 = vrot.slane %v38, %v51
  %v53 = vcombine.high %v45, %v45
  %v54 = vcombine.high %v52, %v52
  %vm63 = vcmask 1041408
  %v64 = vsel %vm63, %v28, 0.0
  %v65 = vsel %vm63, %v36, 0.0
  %v66 = vadd.f32 %v64, %v65
  %v67 = vsel %vm63, %v35, 0.0
  %v68 = vadd.f32 %v66, %v67
  %v69 = vsel %vm63, %v37, 0.0
  %v70 = vadd.f32 %v68, %v69
  %v71 = vsel %vm63, %v45, 0.0
  %v72 = vadd.f32 %v70, %v71
  %v73 = vsel %vm63, %v53, 0.0
  %v74 = vadd.f32 %v72, %v73
  %v75 = vsel %vm63, %v52, 0.0
  %v76 = vadd.f32 %v74, %v75
  %v77 = vsel %vm63, %v54, 0.0
  %v78 = vadd.f32 %v76, %v77
  %79 = vadd.xlane.f32.xlu0 %v78
  %v80 = vpop.xlane.xlu0 %79
  %vm81 = vcmask 1024
  %82 = vst.msk [vmem:[%s2] sm:$0x3] %vm81, %v80
  %v83 = vadd.f32 %v13, %v15
  %v84 = vadd.f32 %v14, %v16
  %v87 = vcombine.high %v83, %v83
  %v89 = vunpack.c.l.s4 1983009808
  %v90 = vunpack.c.0.s8 %v89
  %v91 = vlaneseq
  %v92 = vshrl.u32 %v91, 7
  %v93 = vsub.s32 %v90, %v92
  %v94 = vrot.slane %v83, %v93
  %v96 = vunpack.c.l.s4 1983009808
  %v97 = vunpack.c.0.s8 %v96
  %v98 = vlaneseq
  %v99 = vshrl.u32 %v98, 7
  %v100 = vsub.s32 %v97, %v99
  %v101 = vrot.slane %v87, %v100
  %v102 = vcombine.high %v94, %v94
  %v103 = vcombine.high %v101, %v101
  %v104 = vcombine.high %v84, %v84
  %v106 = vunpack.c.l.s4 1983009808
  %v107 = vunpack.c.0.s8 %v106
  %v108 = vlaneseq
  %v109 = vshrl.u32 %v108, 7
  %v110 = vsub.s32 %v107, %v109
  %v111 = vrot.slane %v84, %v110
  %v113 = vunpack.c.l.s4 1983009808
  %v114 = vunpack.c.0.s8 %v113
  %v115 = vlaneseq
  %v116 = vshrl.u32 %v115, 7
  %v117 = vsub.s32 %v114, %v116
  %v118 = vrot.slane %v104, %v117
  %v119 = vcombine.high %v111, %v111
  %v120 = vcombine.high %v118, %v118
  %v129 = vsel %vm63, %v94, 0.0
  %v130 = vsel %vm63, %v102, 0.0
  %v131 = vadd.f32 %v129, %v130
  %v132 = vsel %vm63, %v101, 0.0
  %v133 = vadd.f32 %v131, %v132
  %v134 = vsel %vm63, %v103, 0.0
  %v135 = vadd.f32 %v133, %v134
  %v136 = vsel %vm63, %v111, 0.0
  %v137 = vadd.f32 %v135, %v136
  %v138 = vsel %vm63, %v119, 0.0
  %v139 = vadd.f32 %v137, %v138
  %v140 = vsel %vm63, %v118, 0.0
  %v141 = vadd.f32 %v139, %v140
  %v142 = vsel %vm63, %v120, 0.0
  %v143 = vadd.f32 %v141, %v142
  %144 = vadd.xlane.f32.xlu0 %v143
  %v145 = vpop.xlane.xlu0 %144
  %146 = vst.msk [vmem:[%s3] sm:$0x3] %vm81, %v145
  // Predicated region
  $region10: #{neg_dice_loss.1} parent=0 // pred_check
    _
  $region11: #{neg_dice_loss.1} parent=0 // pred_check_branch
    %148 = sbr.rel (0) target = $region13
  $region12: #{neg_dice_loss.1} parent=0 // pred_region
    _
  $region13: #{neg_dice_loss.1} parent=0 // pred_fallthru
    _
  // Predicated region
  $region14: #{neg_dice_loss.1} parent=0 // pred_check
    _
  $region15: #{neg_dice_loss.1} parent=0 // pred_check_branch
    %150 = sbr.rel (0) target = $region17
  $region16: #{neg_dice_loss.1} parent=0 // pred_region
    _
  $region17: #{neg_dice_loss.1} parent=0 // pred_fallthru
    _
  // Predicated region
  $region18: #{neg_dice_loss.1} parent=0 // pred_check
    _
  $region19: #{neg_dice_loss.1} parent=0 // pred_check_branch
    %152 = sbr.rel (0) target = $region21
  $region20: #{neg_dice_loss.1} parent=0 // pred_region
    _
  $region21: #{neg_dice_loss.1} parent=0 // pred_fallthru
    _
  // Predicated region
  $region22: #{neg_dice_loss.1} parent=0 // pred_check
    _
  $region23: #{neg_dice_loss.1} parent=0 // pred_check_branch
    %154 = sbr.rel (0) target = $region25
  $region24: #{neg_dice_loss.1} parent=0 // pred_region
    _
  $region25: #{neg_dice_loss.1} parent=0 // pred_fallthru
    _

</llo_original>
